<compile_context>
chip_gen: v7x
topology: tpu7x:2x2x1
jax: 0.10.0
libtpu: 0.0.40
codegen_flags: <defaults>
</compile_context>

<pallas_src>
import functools

import jax
import jax.numpy as jnp
import numpy as np
from jax.experimental import pallas as pl
from jax.experimental.pallas import tpu as pltpu


def _layernorm_kernel(gain_ref, bias_ref, x_ref, o_ref, *, eps, hidden):
    # gain_ref / bias_ref: SMEM scalars of shape (1,)
    # x_ref / o_ref: VMEM tiles of shape (tile_rows, hidden)
    x = x_ref[...].astype(jnp.float32)

    # One-pass row statistics (f32 accumulation).
    s1 = jnp.sum(x, axis=-1, keepdims=True)          # sum(x)
    s2 = jnp.sum(x * x, axis=-1, keepdims=True)      # sum(x^2)
    mean = s1 * jnp.float32(1.0 / hidden)
    # Unbiased variance (ddof=1), matching torch.Tensor.std default.
    # NOTE: hidden == 1 yields div-by-zero -> NaN, same as torch.std on 1 element.
    var = (s2 - mean * s1) / jnp.float32(hidden - 1)
    var = jnp.maximum(var, 0.0)                       # guard tiny negative rounding
    std = jnp.sqrt(var)

    # Exact per-row reciprocal (keeps 1e-5 fidelity), then FMA epilogue on the VPU.
    inv = pl.reciprocal(std + jnp.float32(eps), approx=False)   # (tile_rows, 1)
    g = gain_ref[0].astype(jnp.float32)
    b = bias_ref[0].astype(jnp.float32)
    scale = inv * g                                   # per-row scale, gain folded in

    o_ref[...] = ((x - mean) * scale + b).astype(o_ref.dtype)


def layer_normalization(x, gain, bias, eps=1e-6, target_block_bytes=2 * 1024 * 1024):
    """Apply LayerNormalization over the last dim of x using a Pallas TPU kernel."""
    orig_shape = x.shape
    hidden = int(orig_shape[-1])
    rows = int(np.prod(orig_shape[:-1])) if len(orig_shape) > 1 else 1
    x2 = x.reshape(rows, hidden)

    itemsize = jnp.dtype(x.dtype).itemsize
    # Sublane packing granularity: f32 -> 8, bf16 -> 16, int8 -> 32.
    sublane = max(8, 32 // itemsize)

    # Large tiles to amortize per-step pipeline overhead (kernel is memory-bound),
    # capped at what the input actually needs (rounded up to the sublane multiple).
    tr = max(1, target_block_bytes // max(1, hidden * itemsize))
    tr = max(sublane, (tr // sublane) * sublane)
    rows_ceil = ((rows + sublane - 1) // sublane) * sublane
    tile_rows = int(min(tr, rows_ceil))

    grid = (pl.cdiv(rows, tile_rows),)

    kernel = functools.partial(_layernorm_kernel, eps=float(eps), hidden=hidden)

    # VMEM budget: double-buffered in + out blocks, plus f32 intermediates, plus
    # headroom. Clamp to [32 MiB, 48 MiB] -> safe on v5e/v6e (128 MiB physical)
    # and under v7x's 64 MiB physical VMEM.
    block_bytes = tile_rows * hidden * itemsize
    f32_block = tile_rows * hidden * 4
    vmem_limit = int(min(max(4 * block_bytes + 4 * f32_block + (8 << 20), 32 << 20),
                         48 << 20))

    # TODO(synk): for hidden < 128 the lane axis is under-utilized; packing
    # 128 // hidden rows per vreg with a segmented reduction would further improve
    # VPU throughput and give unmasked stores.
    out = pl.pallas_call(
        kernel,
        out_shape=jax.ShapeDtypeStruct((rows, hidden), x.dtype),
        grid=grid,
        in_specs=[
            pl.BlockSpec(memory_space=pltpu.SMEM),              # gain (scalar)
            pl.BlockSpec(memory_space=pltpu.SMEM),              # bias (scalar)
            pl.BlockSpec((tile_rows, hidden), lambda i: (i, 0)),
        ],
        out_specs=pl.BlockSpec((tile_rows, hidden), lambda i: (i, 0)),
        compiler_params=pltpu.CompilerParams(
            dimension_semantics=("parallel",),
            vmem_limit_bytes=vmem_limit),
    )(gain, bias, x2)

    return out.reshape(orig_shape)


def _reference(x, gain, bias, eps=1e-6):
    x = x.astype(jnp.float32)
    mean = jnp.mean(x, axis=-1, keepdims=True)
    std = jnp.std(x, axis=-1, keepdims=True, ddof=1)
    return (x - mean) / (std + eps) * gain[0] + bias[0]


if __name__ == "__main__":
    key = jax.random.PRNGKey(0)
    # batch=2, seq=8, hidden=32  (normalization over hidden)
    x = jax.random.normal(key, (2, 8, 32), dtype=jnp.float32)

    # Deterministic parameter init matching nn.Parameter(torch.ones(1)/zeros(1))
    gain = jnp.ones((1,), dtype=jnp.float32)
    bias = jnp.zeros((1,), dtype=jnp.float32)

    out = layer_normalization(x, gain, bias, eps=1e-6)
    out = jax.block_until_ready(out)

    ref = _reference(x, gain, bias, eps=1e-6)
    np.testing.assert_allclose(np.asarray(out), np.asarray(ref),
                               rtol=1e-5, atol=1e-5)
    print("KERNEL_OK")
</pallas_src>

<mosaic_0001>
module attributes {stable_mosaic.version = 11 : i64} {
  func.func @_layernorm_kernel(%arg0: i32, %arg1: memref<1xf32, #tpu.memory_space<smem>>, %arg2: memref<1xf32, #tpu.memory_space<smem>>, %arg3: memref<16x32xf32, #tpu.memory_space<vmem>>, %arg4: memref<16x32xf32, #tpu.memory_space<vmem>>) attributes {dimension_semantics = [#tpu.dimension_semantics<parallel>], iteration_bounds = array<i64: 1>, scalar_prefetch = 0 : i64, scratch_operands = 0 : i64, tpu.core_type = #tpu.core_type<tc>, window_params = [{transform_indices = @transform_0, window_bounds = array<i64: 1>}, {transform_indices = @transform_1, window_bounds = array<i64: 1>}, {transform_indices = @transform_2, window_bounds = array<i64: 16, 32>}, {transform_indices = @transform_3, window_bounds = array<i64: 16, 32>}]} {
    %c0 = arith.constant 0 : index
    %c0_0 = arith.constant 0 : index
    %0 = vector.load %arg3[%c0, %c0_0] : memref<16x32xf32, #tpu.memory_space<vmem>>, vector<16x32xf32>
    %cst = arith.constant dense<0.000000e+00> : vector<16xf32>
    %1 = vector.multi_reduction <add>, %0, %cst [1] : vector<16x32xf32> to vector<16xf32>
    %2 = vector.shape_cast %1 : vector<16xf32> to vector<16x1xf32>
    %3 = arith.mulf %0, %0 : vector<16x32xf32>
    %cst_1 = arith.constant dense<0.000000e+00> : vector<16xf32>
    %4 = vector.multi_reduction <add>, %3, %cst_1 [1] : vector<16x32xf32> to vector<16xf32>
    %5 = vector.shape_cast %4 : vector<16xf32> to vector<16x1xf32>
    %cst_2 = arith.constant 3.125000e-02 : f32
    %6 = vector.broadcast %cst_2 : f32 to vector<16x1xf32>
    %7 = arith.mulf %2, %6 : vector<16x1xf32>
    %8 = arith.mulf %7, %2 : vector<16x1xf32>
    %9 = arith.subf %5, %8 : vector<16x1xf32>
    %cst_3 = arith.constant 3.100000e+01 : f32
    %10 = vector.broadcast %cst_3 : f32 to vector<16x1xf32>
    %11 = arith.divf %9, %10 : vector<16x1xf32>
    %cst_4 = arith.constant 0.000000e+00 : f32
    %12 = vector.broadcast %cst_4 : f32 to vector<16x1xf32>
    %13 = arith.maximumf %11, %12 : vector<16x1xf32>
    %14 = math.sqrt %13 : vector<16x1xf32>
    %cst_5 = arith.constant 9.99999997E-7 : f32
    %15 = vector.broadcast %cst_5 : f32 to vector<16x1xf32>
    %16 = arith.addf %14, %15 : vector<16x1xf32>
    %17 = tpu.reciprocal %16 : vector<16x1xf32> -> vector<16x1xf32>
    %c0_6 = arith.constant 0 : index
    %18 = memref.load %arg1[%c0_6] : memref<1xf32, #tpu.memory_space<smem>>
    %c0_7 = arith.constant 0 : index
    %19 = memref.load %arg2[%c0_7] : memref<1xf32, #tpu.memory_space<smem>>
    %20 = vector.broadcast %18 : f32 to vector<16x1xf32>
    %21 = arith.mulf %17, %20 : vector<16x1xf32>
    %22 = vector.broadcast %7 : vector<16x1xf32> to vector<16x32xf32>
    %23 = arith.subf %0, %22 : vector<16x32xf32>
    %24 = vector.broadcast %21 : vector<16x1xf32> to vector<16x32xf32>
    %25 = arith.mulf %23, %24 : vector<16x32xf32>
    %26 = vector.broadcast %19 : f32 to vector<16x32xf32>
    %27 = arith.addf %25, %26 : vector<16x32xf32>
    %c0_8 = arith.constant 0 : index
    %c0_9 = arith.constant 0 : index
    %28 = vector.load %arg4[%c0_8, %c0_9] : memref<16x32xf32, #tpu.memory_space<vmem>>, vector<16x32xf32>
    tpu.vector_store %arg4[%c0_8, %c0_9], %27 {strides = array<i32>} : memref<16x32xf32, #tpu.memory_space<vmem>>, vector<16x32xf32>,
    return
  }
  func.func @transform_0(%arg0: i32) -> i32 {
    %c0_i32 = arith.constant 0 : i32
    %c0_i32_0 = arith.constant 0 : i32
    return %c0_i32 : i32
  }
  func.func @transform_1(%arg0: i32) -> i32 {
    %c0_i32 = arith.constant 0 : i32
    %c0_i32_0 = arith.constant 0 : i32
    return %c0_i32 : i32
  }
  func.func @transform_2(%arg0: i32) -> (i32, i32) {
    %c0_i32 = arith.constant 0 : i32
    %c0_i32_0 = arith.constant 0 : i32
    return %arg0, %c0_i32 : i32, i32
  }
  func.func @transform_3(%arg0: i32) -> (i32, i32) {
    %c0_i32 = arith.constant 0 : i32
    %c0_i32_0 = arith.constant 0 : i32
    return %arg0, %c0_i32 : i32, i32
  }
}

</mosaic_0001>

<llo_original>
// kernel: tpu_custom_call.1
$region0: #{tpu_custom_call.1}
  #allocation0 [shape = 'u32[]', space=smem, size = 0x4, offset = 0x4, fixed_abs, tag = 'smem constant byte address 0x4 - core index']
  #allocation1 [shape = 'u32[144,128]{1,0:T(1,128)}', space=vmem, size = 0x12000, scoped, tag = 'internal scratch']
  #allocation2 [shape = 'f32[1]{0:T(128)S(6)}', space=smem, size = 0x200, scoped, tag = 'scoped memory for tpu_custom_call.1']
  #allocation3 [shape = 'f32[1]{0:T(128)S(6)}', space=smem, size = 0x200, scoped, tag = 'scoped memory for tpu_custom_call.1']
  %s0 = inlined_call_operand.<no memory space> [shape: f32[1], index: 0, kind: input, shape index: {}]
  %s1 = inlined_call_operand.<no memory space> [shape: f32[1], index: 1, kind: input, shape index: {}]
  %s2 = inlined_call_operand.hbm [shape: f32[16,32], index: 2, kind: input, shape index: {}]
  %s3 = inlined_call_operand.hbm [shape: f32[16,32], index: 3, kind: output, shape index: {}]
  %s4 = sld [smem:[#allocation0]]
  $region26: #{tpu_custom_call.1} parent=0
    _
  %s6 = ssub.s32 1, %s4
  %s7 = scalar_select 0, %s6, %s4
  %8 = sst [smem:[#allocation2]] %s0
  %9 = sst [smem:[#allocation3]] %s1
  $region1: #{tpu_custom_call.1} parent=0
    #allocation4 [shape = 'u8[8192]{0}', space=vmem, size = 0x2000, scoped, tag = 'input window, operand 2, single buffered']
    #allocation5 [shape = 's32[1]{0}', space=sflag, size = 0x4, scoped, tag = 'scoped memory for tpu_custom_call.1']
    #allocation6 [shape = 's32[1]{0}', space=sflag, size = 0x4, scoped, tag = 'scoped memory for tpu_custom_call.1']
    #allocation7 [shape = 'u8[8192]{0}', space=vmem, size = 0x2000, scoped, tag = 'output window, operand 0, single buffered']
    %10 = vsyncpa [#allocation5], 0
    %11 = vsyncpa [#allocation6], 0
    // Predicated region
    $region2: #{tpu_custom_call.1} parent=1 // pred_check
      _
    $region3: #{tpu_custom_call.1} parent=1 // pred_check_branch
      %13 = sbr.rel (0) target = $region5
    $region4: #{tpu_custom_call.1} parent=1 // pred_region
      _
    $region5: #{tpu_custom_call.1} parent=1 // pred_fallthru
      _
    // Predicated region
    $region6: #{tpu_custom_call.1} parent=1 // pred_check
      _
    $region7: #{tpu_custom_call.1} parent=1 // pred_check_branch
      %15 = sbr.rel (0) target = $region9
    $region8: #{tpu_custom_call.1} parent=1 // pred_region
      _
    $region9: #{tpu_custom_call.1} parent=1 // pred_fallthru
      _
    // Predicated region
    $region10: #{tpu_custom_call.1} parent=1 // pred_check
      _
    $region11: #{tpu_custom_call.1} parent=1 // pred_check_branch
      %17 = sbr.rel (0) target = $region13
    $region12: #{tpu_custom_call.1} parent=1 // pred_region
      %s19 = ssub.s32 256, 256
      %20 = vsyncadd [#allocation5], %s19
      %s21 = sshll.u32 [#allocation4], 4
      %s22 = int_to_ptr.vmem [resolvable:$true] %s21
      %27 = dma.hbm_to_vmem [thread:$0]  %s2, 256, %s22, [#allocation5], 128, 128, 8
    $region13: #{tpu_custom_call.1} parent=1 // pred_fallthru
      _
    // Predicated region
    $region14: #{tpu_custom_call.1} parent=1 // pred_check
      _
    $region15: #{tpu_custom_call.1} parent=1 // pred_check_branch
      %29 = sbr.rel (0) target = $region17
    $region16: #{tpu_custom_call.1} parent=1 // pred_region
      %30 = dma.done [#allocation5], 256
    $region17: #{tpu_custom_call.1} parent=1 // pred_fallthru
      _
    %v31 = vld [vmem:[#allocation4] sm:$0xff]
    %v32 = vld [vmem:[#allocation4 + $0x8] sm:$0xff]
    %vm33 = vcmask 261120
    %v34 = vsel %vm33, %v31, 0.0
    %35 = vadd.xlane.f32.xlu0 %v34
    %v36 = vpop.xlane.xlu0 %35
    %v37 = vsel %vm33, %v32, 0.0
    %38 = vadd.xlane.f32.xlu0 %v37
    %v39 = vpop.xlane.xlu0 %38
    %v40 = vmul.f32 %v31, %v31
    %v41 = vmul.f32 %v32, %v32
    %v42 = vsel %vm33, %v40, 0.0
    %43 = vadd.xlane.f32.xlu0 %v42
    %v44 = vpop.xlane.xlu0 %43
    %v45 = vsel %vm33, %v41, 0.0
    %46 = vadd.xlane.f32.xlu0 %v45
    %v47 = vpop.xlane.xlu0 %46
    %v48 = vmul.f32 %v36, 0.03125
    %v49 = vmul.f32 %v39, 0.03125
    %v50 = vmul.f32 %v48, %v36
    %v51 = vmul.f32 %v49, %v39
    %v52 = vsub.f32 %v44, %v50
    %v53 = vsub.f32 %v47, %v51
    %v54 = vrcp.pop 31.0
    %v55 = vmul.f32 %v52, %v54
    %v56 = vmul.f32 %v53, %v54
    %v57 = vmax.f32 %v55, 0.0
    %v58 = vmax.f32 %v56, 0.0
    %v59 = vrsqrt.pop %v57
    %v60 = vmul.f32 %v57, %v59
    %vm61 = vcmp.eq.f32.partialorder %v57, inf
    %v62 = vsel %vm61, %v57, %v60
    %vm63 = vcmp.eq.f32.partialorder %v57, 0.0
    %v64 = vand.u32 %v57, 2147483648
    %v65 = vsel %vm63, %v64, %v62
    %v66 = vrsqrt.pop %v58
    %v67 = vmul.f32 %v58, %v66
    %vm68 = vcmp.eq.f32.partialorder %v58, inf
    %v69 = vsel %vm68, %v58, %v67
    %vm70 = vcmp.eq.f32.partialorder %v58, 0.0
    %v71 = vand.u32 %v58, 2147483648
    %v72 = vsel %vm70, %v71, %v69
    %v73 = vadd.f32 %v65, 1e-06
    %v74 = vadd.f32 %v72, 1e-06
    %v75 = vrcp.pop %v73
    %v76 = vrcp.pop %v74
    %s77 = sld [smem:[#allocation2]]
    %s78 = sld [smem:[#allocation3]]
    %v79 = vstv %s77
    %v80 = vmul.f32 %v75, %v79
    %v81 = vmul.f32 %v76, %v79
    %v82 = vsub.f32 %v31, %v48
    %v83 = vsub.f32 %v32, %v49
    %v84 = vmul.f32 %v82, %v80
    %v85 = vmul.f32 %v83, %v81
    %v86 = vstv %s78
    %v87 = vadd.f32 %v84, %v86
    %v88 = vadd.f32 %v85, %v86
    %89 = vst.msk [vmem:[#allocation7] sm:$0xff] %vm33, %v87
    %90 = vst.msk [vmem:[#allocation7 + $0x8] sm:$0xff] %vm33, %v88
    // Predicated region
    $region18: #{tpu_custom_call.1} parent=1 // pred_check
      _
    $region19: #{tpu_custom_call.1} parent=1 // pred_check_branch
      %92 = sbr.rel (0) target = $region21
    $region20: #{tpu_custom_call.1} parent=1 // pred_region
      %s94 = ssub.s32 256, 256
      %95 = vsyncadd [#allocation6], %s94
      %s96 = sshll.u32 [#allocation7], 4
      %s97 = int_to_ptr.vmem [resolvable:$true] %s96
      %102 = dma.vmem_to_hbm [thread:$0]  %s97, 256, %s3, [#allocation6], 128, 128, 8
    $region21: #{tpu_custom_call.1} parent=1 // pred_fallthru
      _
    // Predicated region
    $region22: #{tpu_custom_call.1} parent=1 // pred_check
      _
    $region23: #{tpu_custom_call.1} parent=1 // pred_check_branch
      %104 = sbr.rel (0) target = $region25
    $region24: #{tpu_custom_call.1} parent=1 // pred_region
      %105 = dma.done [#allocation6], 256
    $region25: #{tpu_custom_call.1} parent=1 // pred_fallthru
      _
    %106 = vsyncpa [#allocation5], 1
    %107 = vsyncpa [#allocation6], 1

</llo_original>
